<compile_context>
chip_gen: v7x
topology: tpu7x:2x2x1
jax: 0.10.0
libtpu: 0.0.40
codegen_flags: <defaults>
</compile_context>

<pallas_src>
import jax
import jax.numpy as jnp
from jax.experimental import pallas as pl
from jax.experimental.pallas import tpu as pltpu


def _round_up(x, m):
    return (x + m - 1) // m * m


# ---------------------------------------------------------------------------
# Pallas kernel: fused 2-layer GCN on the packed (block-diagonal) batch.
#   h1  = relu(A @ (X @ W1) + b1)
#   out =       A @ (h1 @ W2) + b2
# All matmuls run on the MXU in bf16 with f32 accumulation.
# ---------------------------------------------------------------------------
def gcn2_packed_kernel(a_ref, x_ref, w1_ref, b1_ref, w2_ref, b2_ref, o_ref):
    a = a_ref[...]                                                    # [Nt, Nt] bf16
    x = x_ref[...]                                                    # [Nt, Ci] bf16

    # Layer 1.
    xw = jnp.dot(x, w1_ref[...], preferred_element_type=jnp.float32)  # [Nt, Chp] f32
    h1 = jnp.dot(a, xw.astype(jnp.bfloat16),
                 preferred_element_type=jnp.float32) + b1_ref[...]
    h1 = jnp.maximum(h1, 0.0).astype(jnp.bfloat16)                    # ReLU, cast once

    # Layer 2.
    hw = jnp.dot(h1, w2_ref[...], preferred_element_type=jnp.float32)  # [Nt, Cop] f32
    out = jnp.dot(a, hw.astype(jnp.bfloat16),
                  preferred_element_type=jnp.float32) + b2_ref[...]

    o_ref[...] = out                                                  # lane-dense store


# ---------------------------------------------------------------------------
# Packed, padded, GCN-normalized block-diagonal adjacency built directly at
# its final shape (one scatter, one cast) -- no intermediate padded copies.
# ---------------------------------------------------------------------------
def build_packed_norm_adj(edge_index, num_nodes, n_total_padded, edge_attr=None):
    G = edge_index.shape[0]
    offs = (jnp.arange(G, dtype=edge_index.dtype) * num_nodes)[:, None]   # [G,1]
    src = (edge_index[:, 0, :] + offs).reshape(-1)
    dst = (edge_index[:, 1, :] + offs).reshape(-1)
    if edge_attr is None:
        w = jnp.ones(src.shape[0], dtype=jnp.float32)
    else:
        w = edge_attr.reshape(-1).astype(jnp.float32)
    # Self-loops (weight 1) for every real node; padded rows get none -> stay zero.
    loop = jnp.arange(G * num_nodes, dtype=edge_index.dtype)
    src = jnp.concatenate([src, loop])
    dst = jnp.concatenate([dst, loop])
    w = jnp.concatenate([w, jnp.ones(G * num_nodes, jnp.float32)])

    deg = jnp.zeros(n_total_padded, jnp.float32).at[dst].add(w)
    dinv = jnp.where(deg > 0, 1.0 / jnp.sqrt(deg), 0.0)
    norm = dinv[src] * w * dinv[dst]
    # A[dst, src] so (A @ X)[i] = sum_{j -> i} norm_ij * X[j]   (PyG GCNConv).
    a = jnp.zeros((n_total_padded, n_total_padded), jnp.float32).at[dst, src].add(norm)
    return a.astype(jnp.bfloat16)


# ---------------------------------------------------------------------------
# Wrapper: pack graphs block-diagonally, pad only where needed, single-step
# pallas_call.
# ---------------------------------------------------------------------------
def graph_feature_extractor(x, edge_index, params, edge_attr=None):
    """x: [G, N, c_in] f32, edge_index: [G, 2, E] int32, edge_attr: [G, E] or None."""
    w1, b1, w2, b2 = params
    G, N, c_in = x.shape
    c_hidden = w1.shape[1]
    c_out = w2.shape[1]

    Nt = G * N
    Ntp = _round_up(Nt, 8)          # node rows: sublane-aligned only (not 128)
    Chp = _round_up(c_hidden, 128)  # hidden channels lane-dense
    Cop = _round_up(c_out, 128)     # output channels lane-dense

    # Block-diagonal normalized adjacency, built directly at padded shape, bf16.
    a_packed = build_packed_norm_adj(edge_index, N, Ntp, edge_attr)   # [Ntp, Ntp]

    # Pack node features: [G,N,Ci] -> [Ntp, Ci] bf16 (single fused reshape/cast/pad).
    x_flat = x.reshape(Nt, c_in).astype(jnp.bfloat16)
    if Ntp != Nt:
        x_flat = jnp.pad(x_flat, ((0, Ntp - Nt), (0, 0)))

    # Weights/biases: pad only the lane (output-channel) dims; biases stay f32.
    w1_p = jnp.pad(w1, ((0, 0), (0, Chp - c_hidden))).astype(jnp.bfloat16)
    b1_p = jnp.pad(b1, ((0, 0), (0, Chp - c_hidden)))
    w2_p = jnp.pad(w2, ((0, Chp - c_hidden), (0, Cop - c_out))).astype(jnp.bfloat16)
    b2_p = jnp.pad(b2, ((0, 0), (0, Cop - c_out)))

    flops = 2 * Ntp * c_in * Chp + 2 * Ntp * Ntp * Chp \
        + 2 * Ntp * Chp * Cop + 2 * Ntp * Ntp * Cop
    bytes_accessed = (a_packed.size * 2 + x_flat.size * 2
                      + w1_p.size * 2 + w2_p.size * 2
                      + b1_p.size * 4 + b2_p.size * 4
                      + Ntp * Cop * 4)

    out = pl.pallas_call(
        gcn2_packed_kernel,
        out_shape=jax.ShapeDtypeStruct((Ntp, Cop), jnp.float32),
        grid_spec=pltpu.PrefetchScalarGridSpec(
            num_scalar_prefetch=0,
            grid=(1,),
            in_specs=[
                pl.BlockSpec((Ntp, Ntp), lambda i: (0, 0)),   # packed A_hat
                pl.BlockSpec((Ntp, c_in), lambda i: (0, 0)),  # packed X
                pl.BlockSpec((c_in, Chp), lambda i: (0, 0)),  # W1
                pl.BlockSpec((1, Chp), lambda i: (0, 0)),     # b1
                pl.BlockSpec((Chp, Cop), lambda i: (0, 0)),   # W2
                pl.BlockSpec((1, Cop), lambda i: (0, 0)),     # b2
            ],
            out_specs=pl.BlockSpec((Ntp, Cop), lambda i: (0, 0)),
        ),
        compiler_params=pltpu.CompilerParams(
            dimension_semantics=("arbitrary",),
        ),
        cost_estimate=pl.CostEstimate(
            flops=int(flops), transcendentals=0, bytes_accessed=int(bytes_accessed)),
    )(a_packed, x_flat, w1_p, b1_p, w2_p, b2_p)

    # Trim sublane + channel padding, unpack back to [G, N, c_out].
    return out[:Nt, :c_out].reshape(G, N, c_out)


# ---------------------------------------------------------------------------
# Deterministic parameter init (Glorot-uniform-like) for the two GCNConv layers.
# ---------------------------------------------------------------------------
def init_params(key, c_in, c_hidden, c_out):
    k1, k2 = jax.random.split(key)

    def glorot(k, fan_in, fan_out):
        lim = jnp.sqrt(6.0 / (fan_in + fan_out))
        return jax.random.uniform(k, (fan_in, fan_out), jnp.float32, -lim, lim)

    w1 = glorot(k1, c_in, c_hidden)
    b1 = jnp.zeros((1, c_hidden), jnp.float32)
    w2 = glorot(k2, c_hidden, c_out)
    b2 = jnp.zeros((1, c_out), jnp.float32)
    return w1, b1, w2, b2


# ---------------------------------------------------------------------------
# Pure-JAX f32 reference (same math, per graph, no Pallas).
# ---------------------------------------------------------------------------
def _build_norm_adj_f32(edge_index_g, num_nodes, edge_weight=None):
    src, dst = edge_index_g[0], edge_index_g[1]
    if edge_weight is None:
        edge_weight = jnp.ones(src.shape[0], dtype=jnp.float32)
    loop = jnp.arange(num_nodes, dtype=edge_index_g.dtype)
    src = jnp.concatenate([src, loop])
    dst = jnp.concatenate([dst, loop])
    w = jnp.concatenate([edge_weight, jnp.ones(num_nodes, jnp.float32)])
    deg = jnp.zeros(num_nodes, jnp.float32).at[dst].add(w)
    dinv = jnp.where(deg > 0, 1.0 / jnp.sqrt(deg), 0.0)
    norm = dinv[src] * w * dinv[dst]
    return jnp.zeros((num_nodes, num_nodes), jnp.float32).at[dst, src].add(norm)


def reference_forward(x, edge_index, params, edge_attr=None):
    w1, b1, w2, b2 = params
    G, N, _ = x.shape

    def one(ei, xi):
        a = _build_norm_adj_f32(ei, N)
        h1 = jnp.maximum(a @ (xi @ w1) + b1, 0.0)
        return a @ (h1 @ w2) + b2

    return jax.vmap(one)(edge_index, x)


if __name__ == "__main__":
    key = jax.random.PRNGKey(0)
    k_x, k_e, k_p = jax.random.split(key, 3)

    G, N, E = 4, 16, 40
    c_in, c_hidden, c_out = 8, 32, 16   # num_layers=2, heads=1

    x = jax.random.normal(k_x, (G, N, c_in), dtype=jnp.float32)
    edge_index = jax.random.randint(k_e, (G, 2, E), 0, N, dtype=jnp.int32)
    params = init_params(k_p, c_in, c_hidden, c_out)

    fwd = jax.jit(graph_feature_extractor)   # fuses packing/pad ops around the kernel
    out = fwd(x, edge_index, params, edge_attr=None)
    out = jax.block_until_ready(out)

    ref = reference_forward(x, edge_index, params)

    assert out.shape == (G, N, c_out)
    # bf16 MXU operands with f32 accumulation -> ~1e-2 tolerance vs f32 reference.
    assert jnp.allclose(out, ref, atol=2e-2, rtol=2e-2)

    print("KERNEL_OK")
</pallas_src>

<mosaic_0001>
module attributes {stable_mosaic.version = 11 : i64} {
  func.func private @main(%arg0: i32) attributes {dimension_semantics = [#tpu.dimension_semantics<core_parallel>], iteration_bounds = array<i64: 2>, tpu.core_type = #tpu.core_type<sc_scalar_subcore>, window_params = []} {
    return
  }
}

module attributes {stable_mosaic.version = 11 : i64} {
  func.func private @main(%arg0: i32) attributes {dimension_semantics = [#tpu.dimension_semantics<core_parallel>], iteration_bounds = array<i64: 2>, tpu.core_type = #tpu.core_type<sc_scalar_subcore>, window_params = []} {
    return
  }
}

module attributes {stable_mosaic.version = 11 : i64} {
  func.func @gcn2_packed_kernel(%arg0: i32, %arg1: memref<64x64xbf16, #tpu.memory_space<vmem>>, %arg2: memref<64x8xbf16, #tpu.memory_space<vmem>>, %arg3: memref<8x128xbf16, #tpu.memory_space<vmem>>, %arg4: memref<1x128xf32, #tpu.memory_space<vmem>>, %arg5: memref<128x128xbf16, #tpu.memory_space<vmem>>, %arg6: memref<1x128xf32, #tpu.memory_space<vmem>>, %arg7: memref<64x128xf32, #tpu.memory_space<vmem>>) attributes {dimension_semantics = [#tpu.dimension_semantics<arbitrary>], iteration_bounds = array<i64: 1>, scalar_prefetch = 0 : i64, scratch_operands = 0 : i64, tpu.core_type = #tpu.core_type<tc>, window_params = [{pipeline_mode = #tpu.pipeline_mode<synchronous>, transform_indices = @transform_0, window_bounds = array<i64: 64, 64>}, {pipeline_mode = #tpu.pipeline_mode<synchronous>, transform_indices = @transform_1, window_bounds = array<i64: 64, 8>}, {pipeline_mode = #tpu.pipeline_mode<synchronous>, transform_indices = @transform_2, window_bounds = array<i64: 8, 128>}, {pipeline_mode = #tpu.pipeline_mode<synchronous>, transform_indices = @transform_3, window_bounds = array<i64: 1, 128>}, {pipeline_mode = #tpu.pipeline_mode<synchronous>, transform_indices = @transform_4, window_bounds = array<i64: 128, 128>}, {pipeline_mode = #tpu.pipeline_mode<synchronous>, transform_indices = @transform_5, window_bounds = array<i64: 1, 128>}, {pipeline_mode = #tpu.pipeline_mode<synchronous>, transform_indices = @transform_6, window_bounds = array<i64: 64, 128>}]} {
    %c0 = arith.constant 0 : index
    %c0_0 = arith.constant 0 : index
    %0 = vector.load %arg1[%c0, %c0_0] : memref<64x64xbf16, #tpu.memory_space<vmem>>, vector<64x64xbf16>
    %c0_1 = arith.constant 0 : index
    %c0_2 = arith.constant 0 : index
    %1 = vector.load %arg2[%c0_1, %c0_2] : memref<64x8xbf16, #tpu.memory_space<vmem>>, vector<64x8xbf16>
    %c0_3 = arith.constant 0 : index
    %c0_4 = arith.constant 0 : index
    %2 = vector.load %arg3[%c0_3, %c0_4] : memref<8x128xbf16, #tpu.memory_space<vmem>>, vector<8x128xbf16>
    %cst = arith.constant dense<0.000000e+00> : vector<64x128xf32>
    %3 = tpu.matmul %1, %2, %cst {dimension_numbers = #tpu.dot_dimension_numbers<[1], [0], [0], [1], [0, 0, 1, 1], [], []>} : vector<64x8xbf16>, vector<8x128xbf16>, vector<64x128xf32> -> vector<64x128xf32>
    %4 = arith.truncf %3 : vector<64x128xf32> to vector<64x128xbf16>
    %cst_5 = arith.constant dense<0.000000e+00> : vector<64x128xf32>
    %5 = tpu.matmul %0, %4, %cst_5 {dimension_numbers = #tpu.dot_dimension_numbers<[1], [0], [0], [1], [0, 0, 1, 1], [], []>} : vector<64x64xbf16>, vector<64x128xbf16>, vector<64x128xf32> -> vector<64x128xf32>
    %c0_6 = arith.constant 0 : index
    %c0_7 = arith.constant 0 : index
    %6 = vector.load %arg4[%c0_6, %c0_7] : memref<1x128xf32, #tpu.memory_space<vmem>>, vector<1x128xf32>
    %7 = vector.broadcast %6 : vector<1x128xf32> to vector<64x128xf32>
    %8 = arith.addf %5, %7 : vector<64x128xf32>
    %cst_8 = arith.constant 0.000000e+00 : f32
    %9 = vector.broadcast %cst_8 : f32 to vector<64x128xf32>
    %10 = arith.maximumf %8, %9 : vector<64x128xf32>
    %11 = arith.truncf %10 : vector<64x128xf32> to vector<64x128xbf16>
    %c0_9 = arith.constant 0 : index
    %c0_10 = arith.constant 0 : index
    %12 = vector.load %arg5[%c0_9, %c0_10] : memref<128x128xbf16, #tpu.memory_space<vmem>>, vector<128x128xbf16>
    %cst_11 = arith.constant dense<0.000000e+00> : vector<64x128xf32>
    %13 = tpu.matmul %11, %12, %cst_11 {dimension_numbers = #tpu.dot_dimension_numbers<[1], [0], [0], [1], [0, 0, 1, 1], [], []>} : vector<64x128xbf16>, vector<128x128xbf16>, vector<64x128xf32> -> vector<64x128xf32>
    %14 = arith.truncf %13 : vector<64x128xf32> to vector<64x128xbf16>
    %cst_12 = arith.constant dense<0.000000e+00> : vector<64x128xf32>
    %15 = tpu.matmul %0, %14, %cst_12 {dimension_numbers = #tpu.dot_dimension_numbers<[1], [0], [0], [1], [0, 0, 1, 1], [], []>} : vector<64x64xbf16>, vector<64x128xbf16>, vector<64x128xf32> -> vector<64x128xf32>
    %c0_13 = arith.constant 0 : index
    %c0_14 = arith.constant 0 : index
    %16 = vector.load %arg6[%c0_13, %c0_14] : memref<1x128xf32, #tpu.memory_space<vmem>>, vector<1x128xf32>
    %17 = vector.broadcast %16 : vector<1x128xf32> to vector<64x128xf32>
    %18 = arith.addf %15, %17 : vector<64x128xf32>
    %c0_15 = arith.constant 0 : index
    %c0_16 = arith.constant 0 : index
    %19 = vector.load %arg7[%c0_15, %c0_16] : memref<64x128xf32, #tpu.memory_space<vmem>>, vector<64x128xf32>
    tpu.vector_store %arg7[%c0_15, %c0_16], %18 {strides = array<i32>} : memref<64x128xf32, #tpu.memory_space<vmem>>, vector<64x128xf32>,
    return
  }
  func.func @transform_0(%arg0: i32) -> (i32, i32) {
    %c0_i32 = arith.constant 0 : i32
    %c0_i32_0 = arith.constant 0 : i32
    %c0_i32_1 = arith.constant 0 : i32
    return %c0_i32, %c0_i32_0 : i32, i32
  }
  func.func @transform_1(%arg0: i32) -> (i32, i32) {
    %c0_i32 = arith.constant 0 : i32
    %c0_i32_0 = arith.constant 0 : i32
    %c0_i32_1 = arith.constant 0 : i32
    return %c0_i32, %c0_i32_0 : i32, i32
  }
  func.func @transform_2(%arg0: i32) -> (i32, i32) {
    %c0_i32 = arith.constant 0 : i32
    %c0_i32_0 = arith.constant 0 : i32
    %c0_i32_1 = arith.constant 0 : i32
    return %c0_i32, %c0_i32_0 : i32, i32
  }
  func.func @transform_3(%arg0: i32) -> (i32, i32) {
    %c0_i32 = arith.constant 0 : i32
    %c0_i32_0 = arith.constant 0 : i32
    %c0_i32_1 = arith.constant 0 : i32
    return %c0_i32, %c0_i32_0 : i32, i32
  }
  func.func @transform_4(%arg0: i32) -> (i32, i32) {
    %c0_i32 = arith.constant 0 : i32
    %c0_i32_0 = arith.constant 0 : i32
    %c0_i32_1 = arith.constant 0 : i32
    return %c0_i32, %c0_i32_0 : i32, i32
  }
  func.func @transform_5(%arg0: i32) -> (i32, i32) {
    %c0_i32 = arith.constant 0 : i32
    %c0_i32_0 = arith.constant 0 : i32
    %c0_i32_1 = arith.constant 0 : i32
    return %c0_i32, %c0_i32_0 : i32, i32
  }
  func.func @transform_6(%arg0: i32) -> (i32, i32) {
    %c0_i32 = arith.constant 0 : i32
    %c0_i32_0 = arith.constant 0 : i32
    %c0_i32_1 = arith.constant 0 : i32
    return %c0_i32, %c0_i32_0 : i32, i32
  }
}

</mosaic_0001>

<llo_original>
// kernel: mul.3
$region0: #{mul.3}
  #allocation0 [shape = 's32[1]{0}', space=sflag, size = 0x4, scoped, tag = 'scoped memory for mul.3']
  %s0 = inlined_call_operand.vmem [shape: f32[224], index: 0, kind: input, shape index: {}]
  %s1 = inlined_call_operand.vmem [shape: f32[224], index: 1, kind: input, shape index: {}]
  %s2 = inlined_call_operand.vmem [shape: f32[224], index: 2, kind: output, shape index: {}]
  %v3 = vld [vmem:[%s0] sm:$0x3]
  %v4 = vld [vmem:[%s1] sm:$0x3]
  %5 = xla_tuple %v3, %v4
  %6 = xla_tuple %5
  %v7 = vmul.f32 %v3, %v4
  %8 = xla_tuple %v7
  %9 = vst [vmem:[%s2] sm:$0x3] %v7

// kernel: graph_feature_extractor.1
$region0: #{graph_feature_extractor.1}
  #allocation0 [shape = 'u32[]', space=smem, size = 0x4, offset = 0x4, fixed_abs, tag = 'smem constant byte address 0x4 - core index']
  #allocation1 [shape = 'u32[144,128]{1,0:T(1,128)}', space=vmem, size = 0x12000, scoped, tag = 'internal scratch']
  %s0 = inlined_call_operand.vmem [shape: bf16[64,64], index: 0, kind: input, shape index: {}]
  %s1 = inlined_call_operand.vmem [shape: bf16[64,8], index: 1, kind: input, shape index: {}]
  %s2 = inlined_call_operand.vmem [shape: bf16[8,128], index: 2, kind: input, shape index: {}]
  %s3 = inlined_call_operand.vmem [shape: f32[1,128], index: 3, kind: input, shape index: {}]
  %s4 = inlined_call_operand.vmem [shape: bf16[128,128], index: 4, kind: input, shape index: {}]
  %s5 = inlined_call_operand.vmem [shape: f32[1,128], index: 5, kind: input, shape index: {}]
  %s6 = inlined_call_operand.hbm [shape: f32[64,128], index: 6, kind: output, shape index: {}]
  %s7 = sld [smem:[#allocation0]]
  $region34: #{graph_feature_extractor.1} parent=0
    _
  %s9 = ssub.s32 1, %s7
  %s10 = scalar_select 0, %s9, %s7
  $region1: #{graph_feature_extractor.1} parent=0
    #allocation2 [shape = 'u8[32768]{0}', space=vmem, size = 0x8000, scoped, tag = 'output window, operand 0, single buffered']
    #allocation3 [shape = 's32[1]{0}', space=sflag, size = 0x4, scoped, tag = 'scoped memory for graph_feature_extractor.1']
    %11 = vsyncpa [#allocation3], 0
    // Predicated region
    $region2: #{graph_feature_extractor.1} parent=1 // pred_check
      _
    $region3: #{graph_feature_extractor.1} parent=1 // pred_check_branch
      %13 = sbr.rel (0) target = $region5
    $region4: #{graph_feature_extractor.1} parent=1 // pred_region
      _
    $region5: #{graph_feature_extractor.1} parent=1 // pred_fallthru
      _
    // Predicated region
    $region6: #{graph_feature_extractor.1} parent=1 // pred_check
      _
    $region7: #{graph_feature_extractor.1} parent=1 // pred_check_branch
      %15 = sbr.rel (0) target = $region9
    $region8: #{graph_feature_extractor.1} parent=1 // pred_region
      _
    $region9: #{graph_feature_extractor.1} parent=1 // pred_fallthru
      _
    // Predicated region
    $region10: #{graph_feature_extractor.1} parent=1 // pred_check
      _
    $region11: #{graph_feature_extractor.1} parent=1 // pred_check_branch
      %17 = sbr.rel (0) target = $region13
    $region12: #{graph_feature_extractor.1} parent=1 // pred_region
      _
    $region13: #{graph_feature_extractor.1} parent=1 // pred_fallthru
      _
    // Predicated region
    $region14: #{graph_feature_extractor.1} parent=1 // pred_check
      _
    $region15: #{graph_feature_extractor.1} parent=1 // pred_check_branch
      %19 = sbr.rel (0) target = $region17
    $region16: #{graph_feature_extractor.1} parent=1 // pred_region
      _
    $region17: #{graph_feature_extractor.1} parent=1 // pred_fallthru
      _
    // Predicated region
    $region18: #{graph_feature_extractor.1} parent=1 // pred_check
      _
    $region19: #{graph_feature_extractor.1} parent=1 // pred_check_branch
      %21 = sbr.rel (0) target = $region21
    $region20: #{graph_feature_extractor.1} parent=1 // pred_region
      _
    $region21: #{graph_feature_extractor.1} parent=1 // pred_fallthru
      _
    // Predicated region
    $region22: #{graph_feature_extractor.1} parent=1 // pred_check
      _
    $region23: #{graph_feature_extractor.1} parent=1 // pred_check_branch
      %23 = sbr.rel (0) target = $region25
    $region24: #{graph_feature_extractor.1} parent=1 // pred_region
      _
    $region25: #{graph_feature_extractor.1} parent=1 // pred_fallthru
      _
    %v25 = vld [vmem:[%s0] sm:$0xf]
    %v26 = vld [vmem:[%s0 + $0x4] sm:$0xf]
    %v27 = vld [vmem:[%s0 + $0x8] sm:$0xf]
    %v28 = vld [vmem:[%s0 + $0xc] sm:$0xf]
    %v29 = vld [vmem:[%s0 + $0x10] sm:$0xf]
    %v30 = vld [vmem:[%s0 + $0x14] sm:$0xf]
    %v31 = vld [vmem:[%s0 + $0x18] sm:$0xf]
    %v32 = vld [vmem:[%s0 + $0x1c] sm:$0xf]
    %v33 = vld [vmem:[%s1] sm:$0xf]
    %v34 = vld [vmem:[%s1 + $0x4] sm:$0xf]
    %v35 = vld [vmem:[%s1 + $0x8] sm:$0xf]
    %v36 = vld [vmem:[%s1 + $0xc] sm:$0xf]
    %v37 = vld [vmem:[%s1 + $0x10] sm:$0xf]
    %v38 = vld [vmem:[%s1 + $0x14] sm:$0xf]
    %v39 = vld [vmem:[%s1 + $0x18] sm:$0xf]
    %v40 = vld [vmem:[%s1 + $0x1c] sm:$0xf]
    %v41 = vld [vmem:[%s2] sm:$0xf]
    %v50 = vunpack.c.l.b16 %v33
    %v51 = vunpack.c.l.b16 %v34
    %v52 = vunpack.c.l.b16 %v35
    %v53 = vunpack.c.l.b16 %v36
    %v54 = vunpack.c.l.b16 %v37
    %v55 = vunpack.c.l.b16 %v38
    %v56 = vunpack.c.l.b16 %v39
    %v57 = vunpack.c.l.b16 %v40
    %v58 = vpack.c.b16 %v51, %v50
    %v59 = vpack.c.b16 %v53, %v52
    %v60 = vpack.c.b16 %v55, %v54
    %v61 = vpack.c.b16 %v57, %v56
    %vm62 = vcmask 64512
    %v64 = vsel %vm62, %v58, 0
    %v67 = vsel %vm62, %v59, 0
    %v70 = vsel %vm62, %v60, 0
    %v73 = vsel %vm62, %v61, 0
    %vm75 = vcmask 1043456
    %v77 = vsel %vm75, %v41, 0
    %79 = vmatprep.subr.bf16.mxu0 0
    %80 = vmatpush1.bf16.msra.mxu0 %v77
    %81 = vmatprep.subr.bf16.mxu0 0
    %82 = vmatpush1.bf16.msra.mxu0 0
    %83 = vmatprep.subr.bf16.mxu0 0
    %84 = vmatpush1.bf16.msra.mxu0 0
    %85 = vmatprep.subr.bf16.mxu0 0
    %86 = vmatpush1.bf16.msra.mxu0 0
    %87 = vmatprep.subr.bf16.mxu0 0
    %88 = vmatpush1.bf16.msra.mxu0 0
    %89 = vmatprep.subr.bf16.mxu0 0
    %90 = vmatpush1.bf16.msra.mxu0 0
    %91 = vmatprep.subr.bf16.mxu0 0
    %92 = vmatpush1.bf16.msra.mxu0 0
    %93 = vmatprep.subr.bf16.mxu0 0
    %94 = vmatpush1.bf16.msra.mxu0 0
    %95 = vmatprep.subr.bf16.mxu0 0
    %96 = vmatpush1.bf16.msra.mxu0 0
    %97 = vmatprep.subr.bf16.mxu0 0
    %98 = vmatpush1.bf16.msra.mxu0 0
    %99 = vmatprep.subr.bf16.mxu0 0
    %100 = vmatpush1.bf16.msra.mxu0 0
    %101 = vmatprep.subr.bf16.mxu0 0
    %102 = vmatpush1.bf16.msra.mxu0 0
    %103 = vmatprep.subr.bf16.mxu0 0
    %104 = vmatpush1.bf16.msra.mxu0 0
    %105 = vmatprep.subr.bf16.mxu0 0
    %106 = vmatpush1.bf16.msra.mxu0 0
    %107 = vmatprep.subr.bf16.mxu0 0
    %108 = vmatpush1.bf16.msra.mxu0 0
    %109 = vmatprep.subr.bf16.mxu0 0
    %110 = vmatpush1.bf16.msra.mxu0 0
    %111 = vmatprep.mubr.bf16.mxu0 0
    %112 = vmatmul.mubr.bf16.gmra.mrb[0].mxu0 %v64
    %v113 = vpop.f32.mrb[0].mxu0
    %v114 = vadd.f32 0.0, %v113
    %v115 = vpop.f32.mrb[0].mxu0
    %v116 = vpop.f32.mrb[0].mxu0
    %v117 = vadd.f32 0.0, %v116
    %v118 = vpop.f32.mrb[0].mxu0
    %119 = vmatprep.mubr.bf16.mxu0 0
    %120 = vmatmul.mubr.bf16.gmra.mrb[0].mxu0 %v67
    %v121 = vpop.f32.mrb[0].mxu0
    %v122 = vadd.f32 0.0, %v121
    %v123 = vpop.f32.mrb[0].mxu0
    %v124 = vpop.f32.mrb[0].mxu0
    %v125 = vadd.f32 0.0, %v124
    %v126 = vpop.f32.mrb[0].mxu0
    %127 = vmatprep.mubr.bf16.mxu0 0
    %128 = vmatmul.mubr.bf16.gmra.mrb[0].mxu0 %v70
    %v129 = vpop.f32.mrb[0].mxu0
    %v130 = vadd.f32 0.0, %v129
    %v131 = vpop.f32.mrb[0].mxu0
    %v132 = vpop.f32.mrb[0].mxu0
    %v133 = vadd.f32 0.0, %v132
    %v134 = vpop.f32.mrb[0].mxu0
    %135 = vmatprep.mubr.bf16.mxu0 0
    %136 = vmatmul.mubr.bf16.gmra.mrb[0].mxu0 %v73
    %v137 = vpop.f32.mrb[0].mxu0
    %v138 = vadd.f32 0.0, %v137
    %v139 = vpop.f32.mrb[0].mxu0
    %v140 = vpop.f32.mrb[0].mxu0
    %v141 = vadd.f32 0.0, %v140
    %v142 = vpop.f32.mrb[0].mxu0
    %143 = vdwg.mxu0
    %v144 = vpack.c.bf16 %v117, %v114
    %v145 = vpack.c.bf16 %v125, %v122
    %v146 = vpack.c.bf16 %v133, %v130
    %v147 = vpack.c.bf16 %v141, %v138
    %v148 = vld [vmem:[%s3] sm:$0x1]
    %v150 = vlaneseq
    %v151 = vshrl.u32 %v150, 7
    %v152 = vsub.s32 0, %v151
    %v153 = vrot.slane %v148, %v152
    %v163 = vunpack.c.l.b16 %v25
    %v164 = vunpack.c.l.b16 %v26
    %v165 = vunpack.c.l.b16 %v27
    %v166 = vunpack.c.l.b16 %v28
    %v167 = vunpack.c.l.b16 %v29
    %v168 = vunpack.c.l.b16 %v30
    %v169 = vunpack.c.l.b16 %v31
    %v170 = vunpack.c.l.b16 %v32
    %v171 = vpack.c.b16 %v164, %v163
    %v172 = vpack.c.b16 %v166, %v165
    %v173 = vpack.c.b16 %v168, %v167
    %v174 = vpack.c.b16 %v170, %v169
    %vm175 = vcmask 523264
    %v177 = vsel %vm175, %v171, 0
    %v180 = vsel %vm175, %v172, 0
    %v183 = vsel %vm175, %v173, 0
    %v186 = vsel %vm175, %v174, 0
    %188 = vmatprep.subr.bf16.mxu0 0
    %189 = vmatpush1.bf16.msra.mxu0 %v144
    %190 = vmatprep.subr.bf16.mxu0 0
    %191 = vmatpush1.bf16.msra.mxu0 %v145
    %192 = vmatprep.subr.bf16.mxu0 0
    %193 = vmatpush1.bf16.msra.mxu0 %v146
    %194 = vmatprep.subr.bf16.mxu0 0
    %195 = vmatpush1.bf16.msra.mxu0 %v147
    %196 = vmatprep.subr.bf16.mxu0 0
    %197 = vmatpush1.bf16.msra.mxu0 0
    %198 = vmatprep.subr.bf16.mxu0 0
    %199 = vmatpush1.bf16.msra.mxu0 0
    %200 = vmatprep.subr.bf16.mxu0 0
    %201 = vmatpush1.bf16.msra.mxu0 0
    %202 = vmatprep.subr.bf16.mxu0 0
    %203 = vmatpush1.bf16.msra.mxu0 0
    %204 = vmatprep.subr.bf16.mxu0 0
    %205 = vmatpush1.bf16.msra.mxu0 0
    %206 = vmatprep.subr.bf16.mxu0 0
    %207 = vmatpush1.bf16.msra.mxu0 0
    %208 = vmatprep.subr.bf16.mxu0 0
    %209 = vmatpush1.bf16.msra.mxu0 0
    %210 = vmatprep.subr.bf16.mxu0 0
    %211 = vmatpush1.bf16.msra.mxu0 0
    %212 = vmatprep.subr.bf16.mxu0 0
    %213 = vmatpush1.bf16.msra.mxu0 0
    %214 = vmatprep.subr.bf16.mxu0 0
    %215 = vmatpush1.bf16.msra.mxu0 0
    %216 = vmatprep.subr.bf16.mxu0 0
    %217 = vmatpush1.bf16.msra.mxu0 0
    %218 = vmatprep.subr.bf16.mxu0 0
    %219 = vmatpush1.bf16.msra.mxu0 0
    %220 = vmatprep.mubr.bf16.mxu0 0
    %221 = vmatmul.mubr.bf16.gmra.mrb[0].mxu0 %v177
    %v222 = vpop.f32.mrb[0].mxu0
    %v223 = vadd.f32 %v153, %v222
    %v224 = vpop.f32.mrb[0].mxu0
    %v225 = vpop.f32.mrb[0].mxu0
    %v226 = vadd.f32 %v153, %v225
    %v227 = vpop.f32.mrb[0].mxu0
    %228 = vmatprep.mubr.bf16.mxu0 0
    %229 = vmatmul.mubr.bf16.gmra.mrb[0].mxu0 %v180
    %v230 = vpop.f32.mrb[0].mxu0
    %v231 = vadd.f32 %v153, %v230
    %v232 = vpop.f32.mrb[0].mxu0
    %v233 = vpop.f32.mrb[0].mxu0
    %v234 = vadd.f32 %v153, %v233
    %v235 = vpop.f32.mrb[0].mxu0
    %236 = vmatprep.mubr.bf16.mxu0 0
    %237 = vmatmul.mubr.bf16.gmra.mrb[0].mxu0 %v183
    %v238 = vpop.f32.mrb[0].mxu0
    %v239 = vadd.f32 %v153, %v238
    %v240 = vpop.f32.mrb[0].mxu0
    %v241 = vpop.f32.mrb[0].mxu0
    %v242 = vadd.f32 %v153, %v241
    %v243 = vpop.f32.mrb[0].mxu0
    %244 = vmatprep.mubr.bf16.mxu0 0
    %245 = vmatmul.mubr.bf16.gmra.mrb[0].mxu0 %v186
    %v246 = vpop.f32.mrb[0].mxu0
    %v247 = vadd.f32 %v153, %v246
    %v248 = vpop.f32.mrb[0].mxu0
    %v249 = vpop.f32.mrb[0].mxu0
    %v250 = vadd.f32 %v153, %v249
    %v251 = vpop.f32.mrb[0].mxu0
    %252 = vdwg.mxu0
    %v253 = vmax.f32 %v223, 0.0
    %v254 = vmax.f32 %v226, 0.0
    %v255 = vmax.f32 %v231, 0.0
    %v256 = vmax.f32 %v234, 0.0
    %v257 = vmax.f32 %v239, 0.0
    %v258 = vmax.f32 %v242, 0.0
    %v259 = vmax.f32 %v247, 0.0
    %v260 = vmax.f32 %v250, 0.0
    %v261 = vpack.c.bf16 %v254, %v253
    %v262 = vpack.c.bf16 %v256, %v255
    %v263 = vpack.c.bf16 %v258, %v257
    %v264 = vpack.c.bf16 %v260, %v259
    %v265 = vld [vmem:[%s4] sm:$0xf]
    %v266 = vld [vmem:[%s4 + $0x4] sm:$0xf]
    %v267 = vld [vmem:[%s4 + $0x8] sm:$0xf]
    %v268 = vld [vmem:[%s4 + $0xc] sm:$0xf]
    %v269 = vld [vmem:[%s4 + $0x10] sm:$0xf]
    %v270 = vld [vmem:[%s4 + $0x14] sm:$0xf]
    %v271 = vld [vmem:[%s4 + $0x18] sm:$0xf]
    %v272 = vld [vmem:[%s4 + $0x1c] sm:$0xf]
    %v273 = vld [vmem:[%s4 + $0x20] sm:$0xf]
    %v274 = vld [vmem:[%s4 + $0x24] sm:$0xf]
    %v275 = vld [vmem:[%s4 + $0x28] sm:$0xf]
    %v276 = vld [vmem:[%s4 + $0x2c] sm:$0xf]
    %v277 = vld [vmem:[%s4 + $0x30] sm:$0xf]
    %v278 = vld [vmem:[%s4 + $0x34] sm:$0xf]
    %v279 = vld [vmem:[%s4 + $0x38] sm:$0xf]
    %v280 = vld [vmem:[%s4 + $0x3c] sm:$0xf]
    %v297 = vunpack.c.l.b16 %v265
    %v298 = vunpack.c.l.b16 %v266
    %v299 = vunpack.c.l.b16 %v267
    %v300 = vunpack.c.l.b16 %v268
    %v301 = vunpack.c.l.b16 %v269
    %v302 = vunpack.c.l.b16 %v270
    %v303 = vunpack.c.l.b16 %v271
    %v304 = vunpack.c.l.b16 %v272
    %v305 = vunpack.c.l.b16 %v273
    %v306 = vunpack.c.l.b16 %v274
    %v307 = vunpack.c.l.b16 %v275
    %v308 = vunpack.c.l.b16 %v276
    %v309 = vunpack.c.l.b16 %v277
    %v310 = vunpack.c.l.b16 %v278
    %v311 = vunpack.c.l.b16 %v279
    %v312 = vunpack.c.l.b16 %v280
    %v313 = vpack.c.b16 %v298, %v297
    %v314 = vpack.c.b16 %v300, %v299
    %v315 = vpack.c.b16 %v302, %v301
    %v316 = vpack.c.b16 %v304, %v303
    %v317 = vpack.c.b16 %v306, %v305
    %v318 = vpack.c.b16 %v308, %v307
    %v319 = vpack.c.b16 %v310, %v309
    %v320 = vpack.c.b16 %v312, %v311
    %329 = vmatprep.subr.bf16.mxu0 0
    %330 = vmatpush1.bf16.msra.mxu0 %v313
    %331 = vmatprep.subr.bf16.mxu0 0
    %332 = vmatpush1.bf16.msra.mxu0 %v314
    %333 = vmatprep.subr.bf16.mxu0 0
    %334 = vmatpush1.bf16.msra.mxu0 %v315
    %335 = vmatprep.subr.bf16.mxu0 0
    %336 = vmatpush1.bf16.msra.mxu0 %v316
    %337 = vmatprep.subr.bf16.mxu0 0
    %338 = vmatpush1.bf16.msra.mxu0 %v317
    %339 = vmatprep.subr.bf16.mxu0 0
    %340 = vmatpush1.bf16.msra.mxu0 %v318
    %341 = vmatprep.subr.bf16.mxu0 0
    %342 = vmatpush1.bf16.msra.mxu0 %v319
    %343 = vmatprep.subr.bf16.mxu0 0
    %344 = vmatpush1.bf16.msra.mxu0 %v320
    %345 = vmatprep.subr.bf16.mxu0 0
    %346 = vmatpush1.bf16.msra.mxu0 0
    %347 = vmatprep.subr.bf16.mxu0 0
    %348 = vmatpush1.bf16.msra.mxu0 0
    %349 = vmatprep.subr.bf16.mxu0 0
    %350 = vmatpush1.bf16.msra.mxu0 0
    %351 = vmatprep.subr.bf16.mxu0 0
    %352 = vmatpush1.bf16.msra.mxu0 0
    %353 = vmatprep.subr.bf16.mxu0 0
    %354 = vmatpush1.bf16.msra.mxu0 0
    %355 = vmatprep.subr.bf16.mxu0 0
    %356 = vmatpush1.bf16.msra.mxu0 0
    %357 = vmatprep.subr.bf16.mxu0 0
    %358 = vmatpush1.bf16.msra.mxu0 0
    %359 = vmatprep.subr.bf16.mxu0 0
    %360 = vmatpush1.bf16.msra.mxu0 0
    %361 = vmatprep.mubr.bf16.mxu0 0
    %362 = vmatmul.mubr.bf16.gmra.mrb[0].mxu0 %v261
    %v363 = vpop.f32.mrb[0].mxu0
    %v364 = vadd.f32 0.0, %v363
    %v365 = vpop.f32.mrb[0].mxu0
    %v366 = vpop.f32.mrb[0].mxu0
    %v367 = vadd.f32 0.0, %v366
    %v368 = vpop.f32.mrb[0].mxu0
    %369 = vmatprep.mubr.bf16.mxu0 0
    %370 = vmatmul.mubr.bf16.gmra.mrb[0].mxu0 %v262
    %v371 = vpop.f32.mrb[0].mxu0
    %v372 = vadd.f32 0.0, %v371
    %v373 = vpop.f32.mrb[0].mxu0
    %v374 = vpop.f32.mrb[0].mxu0
    %v375 = vadd.f32 0.0, %v374
    %v376 = vpop.f32.mrb[0].mxu0
    %377 = vmatprep.mubr.bf16.mxu0 0
    %378 = vmatmul.mubr.bf16.gmra.mrb[0].mxu0 %v263
    %v379 = vpop.f32.mrb[0].mxu0
    %v380 = vadd.f32 0.0, %v379
    %v381 = vpop.f32.mrb[0].mxu0
    %v382 = vpop.f32.mrb[0].mxu0
    %v383 = vadd.f32 0.0, %v382
    %v384 = vpop.f32.mrb[0].mxu0
    %385 = vmatprep.mubr.bf16.mxu0 0
    %386 = vmatmul.mubr.bf16.gmra.mrb[0].mxu0 %v264
    %v387 = vpop.f32.mrb[0].mxu0
    %v388 = vadd.f32 0.0, %v387
    %v389 = vpop.f32.mrb[0].mxu0
    %v390 = vpop.f32.mrb[0].mxu0
    %v391 = vadd.f32 0.0, %v390
    %v392 = vpop.f32.mrb[0].mxu0
    %393 = vdwg.mxu0
    %v394 = vpack.c.bf16 %v367, %v364
    %v395 = vpack.c.bf16 %v375, %v372
    %v396 = vpack.c.bf16 %v383, %v380
    %v397 = vpack.c.bf16 %v391, %v388
    %v398 = vld [vmem:[%s5] sm:$0x1]
    %v400 = vlaneseq
    %v401 = vshrl.u32 %v400, 7
    %v402 = vsub.s32 0, %v401
    %v403 = vrot.slane %v398, %v402
    %405 = vmatprep.subr.bf16.mxu0 0
    %406 = vmatpush1.bf16.msra.mxu0 %v394
    %407 = vmatprep.subr.bf16.mxu0 0
    %408 = vmatpush1.bf16.msra.mxu0 %v395
    %409 = vmatprep.subr.bf16.mxu0 0
    %410 = vmatpush1.bf16.msra.mxu0 %v396
    %411 = vmatprep.subr.bf16.mxu0 0
    %412 = vmatpush1.bf16.msra.mxu0 %v397
    %413 = vmatprep.subr.bf16.mxu0 0
    %414 = vmatpush1.bf16.msra.mxu0 0
    %415 = vmatprep.subr.bf16.mxu0 0
    %416 = vmatpush1.bf16.msra.mxu0 0
    %417 = vmatprep.subr.bf16.mxu0 0
    %418 = vmatpush1.bf16.msra.mxu0 0
    %419 = vmatprep.subr.bf16.mxu0 0
    %420 = vmatpush1.bf16.msra.mxu0 0
    %421 = vmatprep.subr.bf16.mxu0 0
    %422 = vmatpush1.bf16.msra.mxu0 0
    %423 = vmatprep.subr.bf16.mxu0 0
    %424 = vmatpush1.bf16.msra.mxu0 0
    %425 = vmatprep.subr.bf16.mxu0 0
    %426 = vmatpush1.bf16.msra.mxu0 0
    %427 = vmatprep.subr.bf16.mxu0 0
    %428 = vmatpush1.bf16.msra.mxu0 0
    %429 = vmatprep.subr.bf16.mxu0 0
    %430 = vmatpush1.bf16.msra.mxu0 0
    %431 = vmatprep.subr.bf16.mxu0 0
    %432 = vmatpush1.bf16.msra.mxu0 0
    %433 = vmatprep.subr.bf16.mxu0 0
    %434 = vmatpush1.bf16.msra.mxu0 0
    %435 = vmatprep.subr.bf16.mxu0 0
    %436 = vmatpush1.bf16.msra.mxu0 0
    %437 = vmatprep.mubr.bf16.mxu0 0
    %438 = vmatmul.mubr.bf16.gmra.mrb[0].mxu0 %v177
    %v439 = vpop.f32.mrb[0].mxu0
    %v440 = vadd.f32 %v403, %v439
    %v441 = vpop.f32.mrb[0].mxu0
    %v442 = vpop.f32.mrb[0].mxu0
    %v443 = vadd.f32 %v403, %v442
    %v444 = vpop.f32.mrb[0].mxu0
    %445 = vmatprep.mubr.bf16.mxu0 0
    %446 = vmatmul.mubr.bf16.gmra.mrb[0].mxu0 %v180
    %v447 = vpop.f32.mrb[0].mxu0
    %v448 = vadd.f32 %v403, %v447
    %v449 = vpop.f32.mrb[0].mxu0
    %v450 = vpop.f32.mrb[0].mxu0
    %v451 = vadd.f32 %v403, %v450
    %v452 = vpop.f32.mrb[0].mxu0
    %453 = vmatprep.mubr.bf16.mxu0 0
    %454 = vmatmul.mubr.bf16.gmra.mrb[0].mxu0 %v183
    %v455 = vpop.f32.mrb[0].mxu0
    %v456 = vadd.f32 %v403, %v455
    %v457 = vpop.f32.mrb[0].mxu0
    %v458 = vpop.f32.mrb[0].mxu0
    %v459 = vadd.f32 %v403, %v458
    %v460 = vpop.f32.mrb[0].mxu0
    %461 = vmatprep.mubr.bf16.mxu0 0
    %462 = vmatmul.mubr.bf16.gmra.mrb[0].mxu0 %v186
    %v463 = vpop.f32.mrb[0].mxu0
    %v464 = vadd.f32 %v403, %v463
    %v465 = vpop.f32.mrb[0].mxu0
    %v466 = vpop.f32.mrb[0].mxu0
    %v467 = vadd.f32 %v403, %v466
    %v468 = vpop.f32.mrb[0].mxu0
    %469 = vdwg.mxu0
    %470 = vst [vmem:[#allocation2] sm:$0xff] %v440
    %471 = vst [vmem:[#allocation2 + $0x8] sm:$0xff] %v443
    %472 = vst [vmem:[#allocation2 + $0x10] sm:$0xff] %v448
    %473 = vst [vmem:[#allocation2 + $0x18] sm:$0xff] %v451
    %474 = vst [vmem:[#allocation2 + $0x20] sm:$0xff] %v456
    %475 = vst [vmem:[#allocation2 + $0x28] sm:$0xff] %v459
    %476 = vst [vmem:[#allocation2 + $0x30] sm:$0xff] %v464
    %477 = vst [vmem:[#allocation2 + $0x38] sm:$0xff] %v467
    // Predicated region
    $region26: #{graph_feature_extractor.1} parent=1 // pred_check
      _
    $region27: #{graph_feature_extractor.1} parent=1 // pred_check_branch
      %479 = sbr.rel (0) target = $region29
    $region28: #{graph_feature_extractor.1} parent=1 // pred_region
      %s481 = ssub.s32 1024, 1024
      %482 = vsyncadd [#allocation3], %s481
      %s483 = sshll.u32 [#allocation2], 4
      %s484 = int_to_ptr.vmem [resolvable:$true] %s483
      %489 = dma.vmem_to_hbm [thread:$0]  %s484, 1024, %s6, [#allocation3], 128, 128, 8
    $region29: #{graph_feature_extractor.1} parent=1 // pred_fallthru
      _
    // Predicated region
    $region30: #{graph_feature_extractor.1} parent=1 // pred_check
      _
    $region31: #{graph_feature_extractor.1} parent=1 // pred_check_branch
      %491 = sbr.rel (0) target = $region33
    $region32: #{graph_feature_extractor.1} parent=1 // pred_region
      %492 = dma.done [#allocation3], 1024
    $region33: #{graph_feature_extractor.1} parent=1 // pred_fallthru
      _
    %493 = vsyncpa [#allocation3], 1

</llo_original>
